<compile_context>
chip_gen: v7x
topology: tpu7x:2x2x1
jax: 0.10.0
libtpu: 0.0.40
codegen_flags: <defaults>
</compile_context>

<pallas_src>
import functools
import math

import jax
import jax.numpy as jnp
from jax import lax
from jax.experimental import pallas as pl
from jax.experimental.pallas import tpu as pltpu


def layernorm_kernel(x_ref, gamma_ref, beta_ref, o_ref, *, eps, d_true):
    """One batch tile: per-row mean/std over the (padded) feature axis."""
    x = x_ref[...].astype(jnp.float32)                      # (TB, Dp)
    d_pad = x.shape[-1]
    # Padded columns hold zeros, so the plain sum already equals the true sum.
    mean = jnp.sum(x, axis=-1, keepdims=True) * (1.0 / d_true)     # (TB, 1)
    diff = x - mean
    if d_pad != d_true:
        # Padded columns would contribute (-mean)^2 to the variance: mask them.
        lane = lax.broadcasted_iota(jnp.int32, (1, d_pad), 1)
        diff = jnp.where(lane < d_true, diff, 0.0)
    # torch.Tensor.std default is unbiased: divide by (d - 1).
    var = jnp.sum(diff * diff, axis=-1, keepdims=True) * (1.0 / (d_true - 1))
    std = jnp.sqrt(var)
    # Exact reciprocal: only TB of them per tile, EUP slot is otherwise idle.
    inv = pl.reciprocal(std + eps, approx=False)             # (TB, 1)
    gamma = gamma_ref[...].astype(jnp.float32)               # (1, Dp)
    beta = beta_ref[...].astype(jnp.float32)                 # (1, Dp)
    out = diff * (gamma * inv) + beta                        # one FMA per element
    o_ref[...] = out.astype(o_ref.dtype)


def layer_norm(x, gamma, beta, eps=1e-5, *, target_tile_bytes=None):
    """LayerNorm over all non-batch dims of x (shape (N, C, ...)).

    gamma, beta: per-channel (C,) affine parameters.
    Pass x in its storage dtype (e.g. bf16): the kernel upcasts to f32
    internally and writes back x.dtype; the kernel is HBM-bandwidth bound so
    narrower inputs are ~2x faster than pre-upcast f32.
    """
    N = x.shape[0]
    C = x.shape[1]
    D = math.prod(x.shape[1:])
    assert D > 1, "unbiased std needs at least 2 elements per sample"
    per_chan = D // C

    # Chip-aware sizing (v7x: 64 MiB VMEM/TC; v5e/v6e: 128 MiB).
    try:
        vmem_cap = int(pltpu.get_tpu_info().vmem_capacity_bytes)
    except Exception:
        vmem_cap = 64 * 1024 * 1024
    if target_tile_bytes is None:
        target_tile_bytes = (
            8 * 1024 * 1024 if vmem_cap >= 96 * 1024 * 1024 else 6 * 1024 * 1024
        )
    vmem_limit = max(32 * 1024 * 1024, min((vmem_cap * 3) // 4, 96 * 1024 * 1024))

    # Lane-dense 2D layout: batch on sublanes, features on lanes. Pad the
    # feature axis up to a multiple of 128 (masked in-kernel) so stores are
    # unmasked full-lane vst and sublanes are fully occupied.
    x2 = x.reshape(N, D)
    Dp = pl.cdiv(D, 128) * 128
    if Dp != D:
        x2 = jnp.pad(x2, ((0, 0), (0, Dp - D)))

    # Expand per-channel affine params to per-flattened-element (glue, cold path).
    gamma_full = jnp.repeat(gamma.astype(jnp.float32), per_chan)
    beta_full = jnp.repeat(beta.astype(jnp.float32), per_chan)
    if Dp != D:
        gamma_full = jnp.pad(gamma_full, (0, Dp - D))
        beta_full = jnp.pad(beta_full, (0, Dp - D))
    gamma2 = gamma_full.reshape(1, Dp)
    beta2 = beta_full.reshape(1, Dp)

    # Batch tile: big enough to amortize the ~0.35us per-grid-step overhead,
    # a multiple of 8 (sublane-dense), and clamped so the "parallel" batch
    # axis keeps >= 2 grid steps (megacore sharding on v7x).
    bytes_per_row = Dp * 4                      # f32-equivalent accounting
    tb = max(1, target_tile_bytes // bytes_per_row)
    if N <= 8:
        tb = N                                  # block dim == full array dim is legal
    else:
        tb = min(tb, N, pl.cdiv(N, 2))          # keep at least 2 grid steps
        tb = max(8, (tb // 8) * 8)              # sublane multiple of 8
    grid = (pl.cdiv(N, tb),)

    kernel = functools.partial(layernorm_kernel, eps=eps, d_true=D)
    cost = pl.CostEstimate(
        flops=7 * N * D,
        transcendentals=N,
        bytes_accessed=2 * N * D * x.dtype.itemsize + 2 * Dp * 4,
    )

    def call(single_buffer_consts):
        const_kwargs = (
            {"pipeline_mode": pl.Buffered(1)} if single_buffer_consts else {}
        )
        return pl.pallas_call(
            kernel,
            out_shape=jax.ShapeDtypeStruct((N, Dp), x.dtype),
            grid=grid,
            in_specs=[
                pl.BlockSpec((tb, Dp), lambda i: (i, 0)),
                pl.BlockSpec((1, Dp), lambda i: (0, 0), **const_kwargs),
                pl.BlockSpec((1, Dp), lambda i: (0, 0), **const_kwargs),
            ],
            out_specs=pl.BlockSpec((tb, Dp), lambda i: (i, 0)),
            compiler_params=pltpu.CompilerParams(
                dimension_semantics=("parallel",),   # rows independent
                vmem_limit_bytes=vmem_limit,
            ),
            cost_estimate=cost,
        )(x2, gamma2, beta2)

    try:
        # Single-buffer the constant gamma/beta blocks: their index_map never
        # changes, so a second buffer is dead VMEM that competes with x/out tiles.
        out = call(True)
    except Exception:
        out = call(False)   # conservative fallback if Buffered(1) is unsupported

    if Dp != D:
        out = out[:, :D]
    return out.reshape(x.shape)


def layer_norm_ref(x, gamma, beta, eps=1e-5):
    """Plain-JAX reference matching the PyTorch forward exactly."""
    N = x.shape[0]
    flat = x.reshape(N, -1).astype(jnp.float32)
    mean = flat.mean(axis=1)
    var = jnp.sum((flat - mean[:, None]) ** 2, axis=1) / (flat.shape[1] - 1)
    std = jnp.sqrt(var)
    bshape = (N,) + (1,) * (x.ndim - 1)
    y = (x.astype(jnp.float32) - mean.reshape(bshape)) / (std.reshape(bshape) + eps)
    pshape = (1, -1) + (1,) * (x.ndim - 2)
    y = gamma.reshape(pshape) * y + beta.reshape(pshape)
    return y.astype(x.dtype)


if __name__ == "__main__":
    key = jax.random.PRNGKey(0)
    k1, k2, kg = jax.random.split(key, 3)

    # Case 1: the module-typical shape (D = C*H*W = 1024, multiple of 128).
    N, C, H, W = 2, 4, 16, 16
    x = jax.random.normal(k1, (N, C, H, W), dtype=jnp.float32)
    # deterministic params mirroring __init__: gamma ~ U[0,1), beta = 0
    gamma = jax.random.uniform(kg, (C,), dtype=jnp.float32)
    beta = jnp.zeros((C,), dtype=jnp.float32)

    out = jax.block_until_ready(layer_norm(x, gamma, beta, eps=1e-5))
    ref = layer_norm_ref(x, gamma, beta, eps=1e-5)
    assert out.shape == x.shape
    assert jnp.allclose(out, ref, atol=1e-4, rtol=1e-4), "case-1 mismatch vs reference"

    # Case 2: awkward shape — D (=64) not a multiple of 128 (padded path) and
    # N (=11) not a multiple of the batch tile (masked boundary writes).
    N2, C2, H2, W2 = 11, 4, 4, 4
    x_b = jax.random.normal(k2, (N2, C2, H2, W2), dtype=jnp.float32)
    gamma_b = jax.random.uniform(jax.random.PRNGKey(1), (C2,), dtype=jnp.float32)
    beta_b = 0.1 * jax.random.normal(jax.random.PRNGKey(2), (C2,), dtype=jnp.float32)
    out_b = jax.block_until_ready(
        layer_norm(x_b, gamma_b, beta_b, eps=1e-5, target_tile_bytes=4096)
    )
    ref_b = layer_norm_ref(x_b, gamma_b, beta_b, eps=1e-5)
    assert out_b.shape == x_b.shape
    assert bool(jnp.isfinite(out_b).all()), "non-finite values in ragged/padded path"
    assert jnp.allclose(out_b, ref_b, atol=1e-4, rtol=1e-4), "case-2 mismatch vs reference"

    print("KERNEL_OK")
</pallas_src>

<mosaic_0001>
module attributes {stable_mosaic.version = 11 : i64} {
  func.func @layernorm_kernel(%arg0: i32, %arg1: memref<2x1024xf32, #tpu.memory_space<vmem>>, %arg2: memref<1x1024xf32, #tpu.memory_space<vmem>>, %arg3: memref<1x1024xf32, #tpu.memory_space<vmem>>, %arg4: memref<2x1024xf32, #tpu.memory_space<vmem>>) attributes {dimension_semantics = [#tpu.dimension_semantics<parallel>], iteration_bounds = array<i64: 1>, scalar_prefetch = 0 : i64, scratch_operands = 0 : i64, tpu.core_type = #tpu.core_type<tc>, window_params = [{transform_indices = @transform_0, window_bounds = array<i64: 2, 1024>}, {pipeline_mode = #tpu.pipeline_mode<synchronous>, transform_indices = @transform_1, window_bounds = array<i64: 1, 1024>}, {pipeline_mode = #tpu.pipeline_mode<synchronous>, transform_indices = @transform_2, window_bounds = array<i64: 1, 1024>}, {transform_indices = @transform_3, window_bounds = array<i64: 2, 1024>}]} {
    %c0 = arith.constant 0 : index
    %c0_0 = arith.constant 0 : index
    %0 = vector.load %arg1[%c0, %c0_0] : memref<2x1024xf32, #tpu.memory_space<vmem>>, vector<2x1024xf32>
    %cst = arith.constant dense<0.000000e+00> : vector<2xf32>
    %1 = vector.multi_reduction <add>, %0, %cst [1] : vector<2x1024xf32> to vector<2xf32>
    %2 = vector.shape_cast %1 : vector<2xf32> to vector<2x1xf32>
    %cst_1 = arith.constant 9.765625E-4 : f32
    %3 = vector.broadcast %cst_1 : f32 to vector<2x1xf32>
    %4 = arith.mulf %2, %3 : vector<2x1xf32>
    %5 = vector.broadcast %4 : vector<2x1xf32> to vector<2x1024xf32>
    %6 = arith.subf %0, %5 : vector<2x1024xf32>
    %7 = arith.mulf %6, %6 : vector<2x1024xf32>
    %cst_2 = arith.constant dense<0.000000e+00> : vector<2xf32>
    %8 = vector.multi_reduction <add>, %7, %cst_2 [1] : vector<2x1024xf32> to vector<2xf32>
    %9 = vector.shape_cast %8 : vector<2xf32> to vector<2x1xf32>
    %cst_3 = arith.constant 9.77517105E-4 : f32
    %10 = vector.broadcast %cst_3 : f32 to vector<2x1xf32>
    %11 = arith.mulf %9, %10 : vector<2x1xf32>
    %12 = math.sqrt %11 : vector<2x1xf32>
    %cst_4 = arith.constant 9.99999974E-6 : f32
    %13 = vector.broadcast %cst_4 : f32 to vector<2x1xf32>
    %14 = arith.addf %12, %13 : vector<2x1xf32>
    %15 = tpu.reciprocal %14 : vector<2x1xf32> -> vector<2x1xf32>
    %c0_5 = arith.constant 0 : index
    %c0_6 = arith.constant 0 : index
    %16 = vector.load %arg2[%c0_5, %c0_6] : memref<1x1024xf32, #tpu.memory_space<vmem>>, vector<1x1024xf32>
    %c0_7 = arith.constant 0 : index
    %c0_8 = arith.constant 0 : index
    %17 = vector.load %arg3[%c0_7, %c0_8] : memref<1x1024xf32, #tpu.memory_space<vmem>>, vector<1x1024xf32>
    %18 = vector.broadcast %16 : vector<1x1024xf32> to vector<2x1024xf32>
    %19 = vector.broadcast %15 : vector<2x1xf32> to vector<2x1024xf32>
    %20 = arith.mulf %18, %19 : vector<2x1024xf32>
    %21 = arith.mulf %6, %20 : vector<2x1024xf32>
    %22 = vector.broadcast %17 : vector<1x1024xf32> to vector<2x1024xf32>
    %23 = arith.addf %21, %22 : vector<2x1024xf32>
    %c0_9 = arith.constant 0 : index
    %c0_10 = arith.constant 0 : index
    %24 = vector.load %arg4[%c0_9, %c0_10] : memref<2x1024xf32, #tpu.memory_space<vmem>>, vector<2x1024xf32>
    tpu.vector_store %arg4[%c0_9, %c0_10], %23 {strides = array<i32>} : memref<2x1024xf32, #tpu.memory_space<vmem>>, vector<2x1024xf32>,
    return
  }
  func.func @transform_0(%arg0: i32) -> (i32, i32) {
    %c0_i32 = arith.constant 0 : i32
    %c0_i32_0 = arith.constant 0 : i32
    return %arg0, %c0_i32 : i32, i32
  }
  func.func @transform_1(%arg0: i32) -> (i32, i32) {
    %c0_i32 = arith.constant 0 : i32
    %c0_i32_0 = arith.constant 0 : i32
    %c0_i32_1 = arith.constant 0 : i32
    return %c0_i32, %c0_i32_0 : i32, i32
  }
  func.func @transform_2(%arg0: i32) -> (i32, i32) {
    %c0_i32 = arith.constant 0 : i32
    %c0_i32_0 = arith.constant 0 : i32
    %c0_i32_1 = arith.constant 0 : i32
    return %c0_i32, %c0_i32_0 : i32, i32
  }
  func.func @transform_3(%arg0: i32) -> (i32, i32) {
    %c0_i32 = arith.constant 0 : i32
    %c0_i32_0 = arith.constant 0 : i32
    return %arg0, %c0_i32 : i32, i32
  }
}

module attributes {stable_mosaic.version = 11 : i64} {
  func.func @layernorm_kernel(%arg0: i32, %arg1: memref<2x1024xf32, #tpu.memory_space<vmem>>, %arg2: memref<1x1024xf32, #tpu.memory_space<vmem>>, %arg3: memref<1x1024xf32, #tpu.memory_space<vmem>>, %arg4: memref<2x1024xf32, #tpu.memory_space<vmem>>) attributes {dimension_semantics = [#tpu.dimension_semantics<parallel>], iteration_bounds = array<i64: 1>, scalar_prefetch = 0 : i64, scratch_operands = 0 : i64, tpu.core_type = #tpu.core_type<tc>, window_params = [{transform_indices = @transform_0, window_bounds = array<i64: 2, 1024>}, {pipeline_mode = #tpu.pipeline_mode<synchronous>, transform_indices = @transform_1, window_bounds = array<i64: 1, 1024>}, {pipeline_mode = #tpu.pipeline_mode<synchronous>, transform_indices = @transform_2, window_bounds = array<i64: 1, 1024>}, {transform_indices = @transform_3, window_bounds = array<i64: 2, 1024>}]} {
    %c0 = arith.constant 0 : index
    %c0_0 = arith.constant 0 : index
    %0 = vector.load %arg1[%c0, %c0_0] : memref<2x1024xf32, #tpu.memory_space<vmem>>, vector<2x1024xf32>
    %cst = arith.constant dense<0.000000e+00> : vector<2xf32>
    %1 = vector.multi_reduction <add>, %0, %cst [1] : vector<2x1024xf32> to vector<2xf32>
    %2 = vector.shape_cast %1 : vector<2xf32> to vector<2x1xf32>
    %cst_1 = arith.constant 9.765625E-4 : f32
    %3 = vector.broadcast %cst_1 : f32 to vector<2x1xf32>
    %4 = arith.mulf %2, %3 : vector<2x1xf32>
    %5 = vector.broadcast %4 : vector<2x1xf32> to vector<2x1024xf32>
    %6 = arith.subf %0, %5 : vector<2x1024xf32>
    %7 = arith.mulf %6, %6 : vector<2x1024xf32>
    %cst_2 = arith.constant dense<0.000000e+00> : vector<2xf32>
    %8 = vector.multi_reduction <add>, %7, %cst_2 [1] : vector<2x1024xf32> to vector<2xf32>
    %9 = vector.shape_cast %8 : vector<2xf32> to vector<2x1xf32>
    %cst_3 = arith.constant 9.77517105E-4 : f32
    %10 = vector.broadcast %cst_3 : f32 to vector<2x1xf32>
    %11 = arith.mulf %9, %10 : vector<2x1xf32>
    %12 = math.sqrt %11 : vector<2x1xf32>
    %cst_4 = arith.constant 9.99999974E-6 : f32
    %13 = vector.broadcast %cst_4 : f32 to vector<2x1xf32>
    %14 = arith.addf %12, %13 : vector<2x1xf32>
    %15 = tpu.reciprocal %14 : vector<2x1xf32> -> vector<2x1xf32>
    %c0_5 = arith.constant 0 : index
    %c0_6 = arith.constant 0 : index
    %16 = vector.load %arg2[%c0_5, %c0_6] : memref<1x1024xf32, #tpu.memory_space<vmem>>, vector<1x1024xf32>
    %c0_7 = arith.constant 0 : index
    %c0_8 = arith.constant 0 : index
    %17 = vector.load %arg3[%c0_7, %c0_8] : memref<1x1024xf32, #tpu.memory_space<vmem>>, vector<1x1024xf32>
    %18 = vector.broadcast %16 : vector<1x1024xf32> to vector<2x1024xf32>
    %19 = vector.broadcast %15 : vector<2x1xf32> to vector<2x1024xf32>
    %20 = arith.mulf %18, %19 : vector<2x1024xf32>
    %21 = arith.mulf %6, %20 : vector<2x1024xf32>
    %22 = vector.broadcast %17 : vector<1x1024xf32> to vector<2x1024xf32>
    %23 = arith.addf %21, %22 : vector<2x1024xf32>
    %c0_9 = arith.constant 0 : index
    %c0_10 = arith.constant 0 : index
    %24 = vector.load %arg4[%c0_9, %c0_10] : memref<2x1024xf32, #tpu.memory_space<vmem>>, vector<2x1024xf32>
    tpu.vector_store %arg4[%c0_9, %c0_10], %23 {strides = array<i32>} : memref<2x1024xf32, #tpu.memory_space<vmem>>, vector<2x1024xf32>,
    return
  }
  func.func @transform_0(%arg0: i32) -> (i32, i32) {
    %c0_i32 = arith.constant 0 : i32
    %c0_i32_0 = arith.constant 0 : i32
    return %arg0, %c0_i32 : i32, i32
  }
  func.func @transform_1(%arg0: i32) -> (i32, i32) {
    %c0_i32 = arith.constant 0 : i32
    %c0_i32_0 = arith.constant 0 : i32
    %c0_i32_1 = arith.constant 0 : i32
    return %c0_i32, %c0_i32_0 : i32, i32
  }
  func.func @transform_2(%arg0: i32) -> (i32, i32) {
    %c0_i32 = arith.constant 0 : i32
    %c0_i32_0 = arith.constant 0 : i32
    %c0_i32_1 = arith.constant 0 : i32
    return %c0_i32, %c0_i32_0 : i32, i32
  }
  func.func @transform_3(%arg0: i32) -> (i32, i32) {
    %c0_i32 = arith.constant 0 : i32
    %c0_i32_0 = arith.constant 0 : i32
    return %arg0, %c0_i32 : i32, i32
  }
}

</mosaic_0001>

<llo_original>
// kernel: tpu_custom_call.1
$region0: #{tpu_custom_call.1}
  #allocation0 [shape = 'u32[]', space=smem, size = 0x4, offset = 0x4, fixed_abs, tag = 'smem constant byte address 0x4 - core index']
  #allocation1 [shape = 'u32[144,128]{1,0:T(1,128)}', space=vmem, size = 0x12000, scoped, tag = 'internal scratch']
  %s0 = inlined_call_operand.hbm [shape: f32[2,1024], index: 0, kind: input, shape index: {}]
  %s1 = inlined_call_operand.hbm [shape: f32[1,1024], index: 1, kind: input, shape index: {}]
  %s2 = inlined_call_operand.hbm [shape: f32[1,1024], index: 2, kind: input, shape index: {}]
  %s3 = inlined_call_operand.hbm [shape: f32[2,1024], index: 3, kind: output, shape index: {}]
  %s4 = sld [smem:[#allocation0]]
  $region34: #{tpu_custom_call.1} parent=0
    _
  %s6 = ssub.s32 1, %s4
  %s7 = scalar_select 0, %s6, %s4
  $region1: #{tpu_custom_call.1} parent=0
    #allocation2 [shape = 'u8[8192]{0}', space=vmem, size = 0x2000, scoped, tag = 'input window, operand 0, single buffered']
    #allocation3 [shape = 's32[1]{0}', space=sflag, size = 0x4, scoped, tag = 'scoped memory for tpu_custom_call.1']
    #allocation4 [shape = 's32[1]{0}', space=sflag, size = 0x4, scoped, tag = 'scoped memory for tpu_custom_call.1']
    #allocation5 [shape = 'u8[4096]{0}', space=vmem, size = 0x1000, scoped, tag = 'input window, operand 1, single buffered']
    #allocation6 [shape = 's32[1]{0}', space=sflag, size = 0x4, scoped, tag = 'scoped memory for tpu_custom_call.1']
    #allocation7 [shape = 'u8[4096]{0}', space=vmem, size = 0x1000, scoped, tag = 'input window, operand 2, single buffered']
    #allocation8 [shape = 'u8[8192]{0}', space=vmem, size = 0x2000, scoped, tag = 'output window, operand 0, single buffered']
    %8 = vsyncpa [#allocation3], 0
    %9 = vsyncpa [#allocation6], 0
    %10 = vsyncpa [#allocation4], 0
    // Predicated region
    $region2: #{tpu_custom_call.1} parent=1 // pred_check
      _
    $region3: #{tpu_custom_call.1} parent=1 // pred_check_branch
      %12 = sbr.rel (0) target = $region5
    $region4: #{tpu_custom_call.1} parent=1 // pred_region
      %s14 = ssub.s32 256, 256
      %15 = vsyncadd [#allocation3], %s14
      %s17 = sshll.u32 [#allocation2], 4
      %s18 = int_to_ptr.vmem [resolvable:$true] %s17
      %20 = dma.hbm_to_vmem [thread:$0]  %s0, 256, %s18, [#allocation3]
    $region5: #{tpu_custom_call.1} parent=1 // pred_fallthru
      _
    // Predicated region
    $region6: #{tpu_custom_call.1} parent=1 // pred_check
      _
    $region7: #{tpu_custom_call.1} parent=1 // pred_check_branch
      %22 = sbr.rel (0) target = $region9
    $region8: #{tpu_custom_call.1} parent=1 // pred_region
      %s24 = ssub.s32 128, 128
      %25 = vsyncadd [#allocation6], %s24
      %s27 = sshll.u32 [#allocation5], 4
      %s28 = int_to_ptr.vmem [resolvable:$true] %s27
      %30 = dma.hbm_to_vmem [thread:$0]  %s1, 128, %s28, [#allocation6]
    $region9: #{tpu_custom_call.1} parent=1 // pred_fallthru
      _
    // Predicated region
    $region10: #{tpu_custom_call.1} parent=1 // pred_check
      _
    $region11: #{tpu_custom_call.1} parent=1 // pred_check_branch
      %32 = sbr.rel (0) target = $region13
    $region12: #{tpu_custom_call.1} parent=1 // pred_region
      %s34 = ssub.s32 128, 128
      %35 = vsyncadd [#allocation6], %s34
      %s37 = sshll.u32 [#allocation7], 4
      %s38 = int_to_ptr.vmem [resolvable:$true] %s37
      %40 = dma.hbm_to_vmem [thread:$0]  %s2, 128, %s38, [#allocation6]
    $region13: #{tpu_custom_call.1} parent=1 // pred_fallthru
      _
    // Predicated region
    $region14: #{tpu_custom_call.1} parent=1 // pred_check
      _
    $region15: #{tpu_custom_call.1} parent=1 // pred_check_branch
      %42 = sbr.rel (0) target = $region17
    $region16: #{tpu_custom_call.1} parent=1 // pred_region
      %43 = dma.done [#allocation3], 256
    $region17: #{tpu_custom_call.1} parent=1 // pred_fallthru
      _
    // Predicated region
    $region18: #{tpu_custom_call.1} parent=1 // pred_check
      _
    $region19: #{tpu_custom_call.1} parent=1 // pred_check_branch
      %45 = sbr.rel (0) target = $region21
    $region20: #{tpu_custom_call.1} parent=1 // pred_region
      %46 = dma.done [#allocation6], 128
    $region21: #{tpu_custom_call.1} parent=1 // pred_fallthru
      _
    // Predicated region
    $region22: #{tpu_custom_call.1} parent=1 // pred_check
      _
    $region23: #{tpu_custom_call.1} parent=1 // pred_check_branch
      %48 = sbr.rel (0) target = $region25
    $region24: #{tpu_custom_call.1} parent=1 // pred_region
      %49 = dma.done [#allocation6], 128
    $region25: #{tpu_custom_call.1} parent=1 // pred_fallthru
      _
    %v50 = vld [vmem:[#allocation2] sm:$0xff]
    %v51 = vld [vmem:[#allocation2 + $0x8] sm:$0xff]
    %v54 = vcombine.high %v50, %v50
    %v56 = vunpack.c.l.s4 1983009808
    %v57 = vunpack.c.0.s8 %v56
    %v58 = vlaneseq
    %v59 = vshrl.u32 %v58, 7
    %v60 = vsub.s32 %v57, %v59
    %v61 = vrot.slane %v50, %v60
    %v63 = vunpack.c.l.s4 1983009808
    %v64 = vunpack.c.0.s8 %v63
    %v65 = vlaneseq
    %v66 = vshrl.u32 %v65, 7
    %v67 = vsub.s32 %v64, %v66
    %v68 = vrot.slane %v54, %v67
    %v69 = vcombine.high %v61, %v61
    %v70 = vcombine.high %v68, %v68
    %v71 = vcombine.high %v51, %v51
    %v73 = vunpack.c.l.s4 1983009808
    %v74 = vunpack.c.0.s8 %v73
    %v75 = vlaneseq
    %v76 = vshrl.u32 %v75, 7
    %v77 = vsub.s32 %v74, %v76
    %v78 = vrot.slane %v51, %v77
    %v80 = vunpack.c.l.s4 1983009808
    %v81 = vunpack.c.0.s8 %v80
    %v82 = vlaneseq
    %v83 = vshrl.u32 %v82, 7
    %v84 = vsub.s32 %v81, %v83
    %v85 = vrot.slane %v71, %v84
    %v86 = vcombine.high %v78, %v78
    %v87 = vcombine.high %v85, %v85
    %vm96 = vcmask 1041408
    %v97 = vsel %vm96, %v61, 0.0
    %v98 = vsel %vm96, %v69, 0.0
    %v99 = vadd.f32 %v97, %v98
    %v100 = vsel %vm96, %v68, 0.0
    %v101 = vadd.f32 %v99, %v100
    %v102 = vsel %vm96, %v70, 0.0
    %v103 = vadd.f32 %v101, %v102
    %v104 = vsel %vm96, %v78, 0.0
    %v105 = vadd.f32 %v103, %v104
    %v106 = vsel %vm96, %v86, 0.0
    %v107 = vadd.f32 %v105, %v106
    %v108 = vsel %vm96, %v85, 0.0
    %v109 = vadd.f32 %v107, %v108
    %v110 = vsel %vm96, %v87, 0.0
    %v111 = vadd.f32 %v109, %v110
    %112 = vadd.xlane.f32.xlu0 %v111
    %v113 = vpop.xlane.xlu0 %112
    %v114 = vmul.f32 %v113, 0.0009765625
    %v117 = vunpack.c.l.s4 269488144
    %v118 = vunpack.c.0.s8 %v117
    %v119 = vlaneseq
    %v120 = vshrl.u32 %v119, 7
    %v121 = vsub.s32 %v118, %v120
    %v122 = vrot.slane %v114, %v121
    %v124 = vsub.f32 %v50, %v122
    %v125 = vsub.f32 %v51, %v122
    %v126 = vmul.f32 %v124, %v124
    %v127 = vmul.f32 %v125, %v125
    %v130 = vcombine.high %v126, %v126
    %v132 = vunpack.c.l.s4 1983009808
    %v133 = vunpack.c.0.s8 %v132
    %v134 = vlaneseq
    %v135 = vshrl.u32 %v134, 7
    %v136 = vsub.s32 %v133, %v135
    %v137 = vrot.slane %v126, %v136
    %v139 = vunpack.c.l.s4 1983009808
    %v140 = vunpack.c.0.s8 %v139
    %v141 = vlaneseq
    %v142 = vshrl.u32 %v141, 7
    %v143 = vsub.s32 %v140, %v142
    %v144 = vrot.slane %v130, %v143
    %v145 = vcombine.high %v137, %v137
    %v146 = vcombine.high %v144, %v144
    %v147 = vcombine.high %v127, %v127
    %v149 = vunpack.c.l.s4 1983009808
    %v150 = vunpack.c.0.s8 %v149
    %v151 = vlaneseq
    %v152 = vshrl.u32 %v151, 7
    %v153 = vsub.s32 %v150, %v152
    %v154 = vrot.slane %v127, %v153
    %v156 = vunpack.c.l.s4 1983009808
    %v157 = vunpack.c.0.s8 %v156
    %v158 = vlaneseq
    %v159 = vshrl.u32 %v158, 7
    %v160 = vsub.s32 %v157, %v159
    %v161 = vrot.slane %v147, %v160
    %v162 = vcombine.high %v154, %v154
    %v163 = vcombine.high %v161, %v161
    %v172 = vsel %vm96, %v137, 0.0
    %v173 = vsel %vm96, %v145, 0.0
    %v174 = vadd.f32 %v172, %v173
    %v175 = vsel %vm96, %v144, 0.0
    %v176 = vadd.f32 %v174, %v175
    %v177 = vsel %vm96, %v146, 0.0
    %v178 = vadd.f32 %v176, %v177
    %v179 = vsel %vm96, %v154, 0.0
    %v180 = vadd.f32 %v178, %v179
    %v181 = vsel %vm96, %v162, 0.0
    %v182 = vadd.f32 %v180, %v181
    %v183 = vsel %vm96, %v161, 0.0
    %v184 = vadd.f32 %v182, %v183
    %v185 = vsel %vm96, %v163, 0.0
    %v186 = vadd.f32 %v184, %v185
    %187 = vadd.xlane.f32.xlu0 %v186
    %v188 = vpop.xlane.xlu0 %187
    %v189 = vmul.f32 %v188, 0.0009775171
    %v190 = vrsqrt.pop %v189
    %v191 = vmul.f32 %v189, %v190
    %vm192 = vcmp.eq.f32.partialorder %v189, inf
    %v193 = vsel %vm192, %v189, %v191
    %vm194 = vcmp.eq.f32.partialorder %v189, 0.0
    %v195 = vand.u32 %v189, 2147483648
    %v196 = vsel %vm194, %v195, %v193
    %v197 = vadd.f32 %v196, 1e-05
    %v198 = vrcp.pop %v197
    %v199 = vld [vmem:[#allocation5] sm:$0xff]
    %v200 = vld [vmem:[#allocation7] sm:$0xff]
    %v202 = vlaneseq
    %v203 = vshrl.u32 %v202, 7
    %v204 = vsub.s32 0, %v203
    %v205 = vrot.slane %v199, %v204
    %v206 = vlaneseq
    %v207 = vshrl.u32 %v206, 7
    %v208 = vsub.s32 1, %v207
    %v209 = vrot.slane %v199, %v208
    %v210 = vlaneseq
    %v211 = vshrl.u32 %v210, 7
    %v212 = vsub.s32 2, %v211
    %v213 = vrot.slane %v199, %v212
    %v214 = vlaneseq
    %v215 = vshrl.u32 %v214, 7
    %v216 = vsub.s32 3, %v215
    %v217 = vrot.slane %v199, %v216
    %v218 = vlaneseq
    %v219 = vshrl.u32 %v218, 7
    %v220 = vsub.s32 4, %v219
    %v221 = vrot.slane %v199, %v220
    %v222 = vlaneseq
    %v223 = vshrl.u32 %v222, 7
    %v224 = vsub.s32 5, %v223
    %v225 = vrot.slane %v199, %v224
    %v226 = vlaneseq
    %v227 = vshrl.u32 %v226, 7
    %v228 = vsub.s32 6, %v227
    %v229 = vrot.slane %v199, %v228
    %v230 = vlaneseq
    %v231 = vshrl.u32 %v230, 7
    %v232 = vsub.s32 7, %v231
    %v233 = vrot.slane %v199, %v232
    %v242 = vmul.f32 %v205, %v198
    %v243 = vmul.f32 %v209, %v198
    %v244 = vmul.f32 %v213, %v198
    %v245 = vmul.f32 %v217, %v198
    %v246 = vmul.f32 %v221, %v198
    %v247 = vmul.f32 %v225, %v198
    %v248 = vmul.f32 %v229, %v198
    %v249 = vmul.f32 %v233, %v198
    %v258 = vcombine.low %v242, %v243
    %v259 = vcombine.low %v244, %v245
    %v261 = vunpack.c.l.s4 1983009808
    %v262 = vunpack.c.0.s8 %v261
    %v263 = vlaneseq
    %v264 = vshrl.u32 %v263, 7
    %v265 = vsub.s32 %v262, %v264
    %v266 = vrot.slane %v258, %v265
    %v268 = vunpack.c.l.s4 1983009808
    %v269 = vunpack.c.0.s8 %v268
    %v270 = vlaneseq
    %v271 = vshrl.u32 %v270, 7
    %v272 = vsub.s32 %v269, %v271
    %v273 = vrot.slane %v259, %v272
    %v274 = vcombine.low %v266, %v273
    %v275 = vcombine.low %v246, %v247
    %v276 = vcombine.low %v248, %v249
    %v278 = vunpack.c.l.s4 1983009808
    %v279 = vunpack.c.0.s8 %v278
    %v280 = vlaneseq
    %v281 = vshrl.u32 %v280, 7
    %v282 = vsub.s32 %v279, %v281
    %v283 = vrot.slane %v275, %v282
    %v285 = vunpack.c.l.s4 1983009808
    %v286 = vunpack.c.0.s8 %v285
    %v287 = vlaneseq
    %v288 = vshrl.u32 %v287, 7
    %v289 = vsub.s32 %v286, %v288
    %v290 = vrot.slane %v276, %v289
    %v291 = vcombine.low %v283, %v290
    %v294 = vmul.f32 %v124, %v274
    %v295 = vmul.f32 %v125, %v291
    %v297 = vlaneseq
    %v298 = vshrl.u32 %v297, 7
    %v299 = vsub.s32 0, %v298
    %v300 = vrot.slane %v200, %v299
    %v301 = vlaneseq
    %v302 = vshrl.u32 %v301, 7
    %v303 = vsub.s32 1, %v302
    %v304 = vrot.slane %v200, %v303
    %v305 = vlaneseq
    %v306 = vshrl.u32 %v305, 7
    %v307 = vsub.s32 2, %v306
    %v308 = vrot.slane %v200, %v307
    %v309 = vlaneseq
    %v310 = vshrl.u32 %v309, 7
    %v311 = vsub.s32 3, %v310
    %v312 = vrot.slane %v200, %v311
    %v313 = vlaneseq
    %v314 = vshrl.u32 %v313, 7
    %v315 = vsub.s32 4, %v314
    %v316 = vrot.slane %v200, %v315
    %v317 = vlaneseq
    %v318 = vshrl.u32 %v317, 7
    %v319 = vsub.s32 5, %v318
    %v320 = vrot.slane %v200, %v319
    %v321 = vlaneseq
    %v322 = vshrl.u32 %v321, 7
    %v323 = vsub.s32 6, %v322
    %v324 = vrot.slane %v200, %v323
    %v325 = vlaneseq
    %v326 = vshrl.u32 %v325, 7
    %v327 = vsub.s32 7, %v326
    %v328 = vrot.slane %v200, %v327
    %v329 = vcombine.low %v300, %v304
    %v330 = vcombine.low %v308, %v312
    %v332 = vunpack.c.l.s4 1983009808
    %v333 = vunpack.c.0.s8 %v332
    %v334 = vlaneseq
    %v335 = vshrl.u32 %v334, 7
    %v336 = vsub.s32 %v333, %v335
    %v337 = vrot.slane %v329, %v336
    %v339 = vunpack.c.l.s4 1983009808
    %v340 = vunpack.c.0.s8 %v339
    %v341 = vlaneseq
    %v342 = vshrl.u32 %v341, 7
    %v343 = vsub.s32 %v340, %v342
    %v344 = vrot.slane %v330, %v343
    %v345 = vcombine.low %v337, %v344
    %v346 = vcombine.low %v316, %v320
    %v347 = vcombine.low %v324, %v328
    %v349 = vunpack.c.l.s4 1983009808
    %v350 = vunpack.c.0.s8 %v349
    %v351 = vlaneseq
    %v352 = vshrl.u32 %v351, 7
    %v353 = vsub.s32 %v350, %v352
    %v354 = vrot.slane %v346, %v353
    %v356 = vunpack.c.l.s4 1983009808
    %v357 = vunpack.c.0.s8 %v356
    %v358 = vlaneseq
    %v359 = vshrl.u32 %v358, 7
    %v360 = vsub.s32 %v357, %v359
    %v361 = vrot.slane %v347, %v360
    %v362 = vcombine.low %v354, %v361
    %v365 = vadd.f32 %v294, %v345
    %v366 = vadd.f32 %v295, %v362
    %367 = vst [vmem:[#allocation8] sm:$0xff] %v365
    %368 = vst [vmem:[#allocation8 + $0x8] sm:$0xff] %v366
    // Predicated region
    $region26: #{tpu_custom_call.1} parent=1 // pred_check
      _
    $region27: #{tpu_custom_call.1} parent=1 // pred_check_branch
      %370 = sbr.rel (0) target = $region29
    $region28: #{tpu_custom_call.1} parent=1 // pred_region
      %s372 = ssub.s32 256, 256
      %373 = vsyncadd [#allocation4], %s372
      %s375 = sshll.u32 [#allocation8], 4
      %s376 = int_to_ptr.vmem [resolvable:$true] %s375
      %378 = dma.vmem_to_hbm [thread:$0]  %s376, 256, %s3, [#allocation4]
    $region29: #{tpu_custom_call.1} parent=1 // pred_fallthru
      _
    // Predicated region
    $region30: #{tpu_custom_call.1} parent=1 // pred_check
      _
    $region31: #{tpu_custom_call.1} parent=1 // pred_check_branch
      %380 = sbr.rel (0) target = $region33
    $region32: #{tpu_custom_call.1} parent=1 // pred_region
      %381 = dma.done [#allocation4], 256
    $region33: #{tpu_custom_call.1} parent=1 // pred_fallthru
      _
    %382 = vsyncpa [#allocation3], 1
    %383 = vsyncpa [#allocation6], 1
    %384 = vsyncpa [#allocation4], 1

// kernel: tpu_custom_call.1
$region0: #{tpu_custom_call.1}
  #allocation0 [shape = 'u32[]', space=smem, size = 0x4, offset = 0x4, fixed_abs, tag = 'smem constant byte address 0x4 - core index']
  #allocation1 [shape = 'u32[144,128]{1,0:T(1,128)}', space=vmem, size = 0x12000, scoped, tag = 'internal scratch']
  %s0 = inlined_call_operand.hbm [shape: f32[2,1024], index: 0, kind: input, shape index: {}]
  %s1 = inlined_call_operand.hbm [shape: f32[1,1024], index: 1, kind: input, shape index: {}]
  %s2 = inlined_call_operand.hbm [shape: f32[1,1024], index: 2, kind: input, shape index: {}]
  %s3 = inlined_call_operand.hbm [shape: f32[2,1024], index: 3, kind: output, shape index: {}]
  %s4 = sld [smem:[#allocation0]]
  $region34: #{tpu_custom_call.1} parent=0
    _
  %s6 = ssub.s32 1, %s4
  %s7 = scalar_select 0, %s6, %s4
  $region1: #{tpu_custom_call.1} parent=0
    #allocation2 [shape = 'u8[8192]{0}', space=vmem, size = 0x2000, scoped, tag = 'input window, operand 0, single buffered']
    #allocation3 [shape = 's32[1]{0}', space=sflag, size = 0x4, scoped, tag = 'scoped memory for tpu_custom_call.1']
    #allocation4 [shape = 's32[1]{0}', space=sflag, size = 0x4, scoped, tag = 'scoped memory for tpu_custom_call.1']
    #allocation5 [shape = 'u8[4096]{0}', space=vmem, size = 0x1000, scoped, tag = 'input window, operand 1, single buffered']
    #allocation6 [shape = 's32[1]{0}', space=sflag, size = 0x4, scoped, tag = 'scoped memory for tpu_custom_call.1']
    #allocation7 [shape = 'u8[4096]{0}', space=vmem, size = 0x1000, scoped, tag = 'input window, operand 2, single buffered']
    #allocation8 [shape = 'u8[8192]{0}', space=vmem, size = 0x2000, scoped, tag = 'output window, operand 0, single buffered']
    %8 = vsyncpa [#allocation3], 0
    %9 = vsyncpa [#allocation6], 0
    %10 = vsyncpa [#allocation4], 0
    // Predicated region
    $region2: #{tpu_custom_call.1} parent=1 // pred_check
      _
    $region3: #{tpu_custom_call.1} parent=1 // pred_check_branch
      %12 = sbr.rel (0) target = $region5
    $region4: #{tpu_custom_call.1} parent=1 // pred_region
      %s14 = ssub.s32 256, 256
      %15 = vsyncadd [#allocation3], %s14
      %s17 = sshll.u32 [#allocation2], 4
      %s18 = int_to_ptr.vmem [resolvable:$true] %s17
      %20 = dma.hbm_to_vmem [thread:$0]  %s0, 256, %s18, [#allocation3]
    $region5: #{tpu_custom_call.1} parent=1 // pred_fallthru
      _
    // Predicated region
    $region6: #{tpu_custom_call.1} parent=1 // pred_check
      _
    $region7: #{tpu_custom_call.1} parent=1 // pred_check_branch
      %22 = sbr.rel (0) target = $region9
    $region8: #{tpu_custom_call.1} parent=1 // pred_region
      %s24 = ssub.s32 128, 128
      %25 = vsyncadd [#allocation6], %s24
      %s27 = sshll.u32 [#allocation5], 4
      %s28 = int_to_ptr.vmem [resolvable:$true] %s27
      %30 = dma.hbm_to_vmem [thread:$0]  %s1, 128, %s28, [#allocation6]
    $region9: #{tpu_custom_call.1} parent=1 // pred_fallthru
      _
    // Predicated region
    $region10: #{tpu_custom_call.1} parent=1 // pred_check
      _
    $region11: #{tpu_custom_call.1} parent=1 // pred_check_branch
      %32 = sbr.rel (0) target = $region13
    $region12: #{tpu_custom_call.1} parent=1 // pred_region
      %s34 = ssub.s32 128, 128
      %35 = vsyncadd [#allocation6], %s34
      %s37 = sshll.u32 [#allocation7], 4
      %s38 = int_to_ptr.vmem [resolvable:$true] %s37
      %40 = dma.hbm_to_vmem [thread:$0]  %s2, 128, %s38, [#allocation6]
    $region13: #{tpu_custom_call.1} parent=1 // pred_fallthru
      _
    // Predicated region
    $region14: #{tpu_custom_call.1} parent=1 // pred_check
      _
    $region15: #{tpu_custom_call.1} parent=1 // pred_check_branch
      %42 = sbr.rel (0) target = $region17
    $region16: #{tpu_custom_call.1} parent=1 // pred_region
      %43 = dma.done [#allocation3], 256
    $region17: #{tpu_custom_call.1} parent=1 // pred_fallthru
      _
    // Predicated region
    $region18: #{tpu_custom_call.1} parent=1 // pred_check
      _
    $region19: #{tpu_custom_call.1} parent=1 // pred_check_branch
      %45 = sbr.rel (0) target = $region21
    $region20: #{tpu_custom_call.1} parent=1 // pred_region
      %46 = dma.done [#allocation6], 128
    $region21: #{tpu_custom_call.1} parent=1 // pred_fallthru
      _
    // Predicated region
    $region22: #{tpu_custom_call.1} parent=1 // pred_check
      _
    $region23: #{tpu_custom_call.1} parent=1 // pred_check_branch
      %48 = sbr.rel (0) target = $region25
    $region24: #{tpu_custom_call.1} parent=1 // pred_region
      %49 = dma.done [#allocation6], 128
    $region25: #{tpu_custom_call.1} parent=1 // pred_fallthru
      _
    %v50 = vld [vmem:[#allocation2] sm:$0xff]
    %v51 = vld [vmem:[#allocation2 + $0x8] sm:$0xff]
    %v54 = vcombine.high %v50, %v50
    %v56 = vunpack.c.l.s4 1983009808
    %v57 = vunpack.c.0.s8 %v56
    %v58 = vlaneseq
    %v59 = vshrl.u32 %v58, 7
    %v60 = vsub.s32 %v57, %v59
    %v61 = vrot.slane %v50, %v60
    %v63 = vunpack.c.l.s4 1983009808
    %v64 = vunpack.c.0.s8 %v63
    %v65 = vlaneseq
    %v66 = vshrl.u32 %v65, 7
    %v67 = vsub.s32 %v64, %v66
    %v68 = vrot.slane %v54, %v67
    %v69 = vcombine.high %v61, %v61
    %v70 = vcombine.high %v68, %v68
    %v71 = vcombine.high %v51, %v51
    %v73 = vunpack.c.l.s4 1983009808
    %v74 = vunpack.c.0.s8 %v73
    %v75 = vlaneseq
    %v76 = vshrl.u32 %v75, 7
    %v77 = vsub.s32 %v74, %v76
    %v78 = vrot.slane %v51, %v77
    %v80 = vunpack.c.l.s4 1983009808
    %v81 = vunpack.c.0.s8 %v80
    %v82 = vlaneseq
    %v83 = vshrl.u32 %v82, 7
    %v84 = vsub.s32 %v81, %v83
    %v85 = vrot.slane %v71, %v84
    %v86 = vcombine.high %v78, %v78
    %v87 = vcombine.high %v85, %v85
    %vm96 = vcmask 1041408
    %v97 = vsel %vm96, %v61, 0.0
    %v98 = vsel %vm96, %v69, 0.0
    %v99 = vadd.f32 %v97, %v98
    %v100 = vsel %vm96, %v68, 0.0
    %v101 = vadd.f32 %v99, %v100
    %v102 = vsel %vm96, %v70, 0.0
    %v103 = vadd.f32 %v101, %v102
    %v104 = vsel %vm96, %v78, 0.0
    %v105 = vadd.f32 %v103, %v104
    %v106 = vsel %vm96, %v86, 0.0
    %v107 = vadd.f32 %v105, %v106
    %v108 = vsel %vm96, %v85, 0.0
    %v109 = vadd.f32 %v107, %v108
    %v110 = vsel %vm96, %v87, 0.0
    %v111 = vadd.f32 %v109, %v110
    %112 = vadd.xlane.f32.xlu0 %v111
    %v113 = vpop.xlane.xlu0 %112
    %v114 = vmul.f32 %v113, 0.0009765625
    %v117 = vunpack.c.l.s4 269488144
    %v118 = vunpack.c.0.s8 %v117
    %v119 = vlaneseq
    %v120 = vshrl.u32 %v119, 7
    %v121 = vsub.s32 %v118, %v120
    %v122 = vrot.slane %v114, %v121
    %v124 = vsub.f32 %v50, %v122
    %v125 = vsub.f32 %v51, %v122
    %v126 = vmul.f32 %v124, %v124
    %v127 = vmul.f32 %v125, %v125
    %v130 = vcombine.high %v126, %v126
    %v132 = vunpack.c.l.s4 1983009808
    %v133 = vunpack.c.0.s8 %v132
    %v134 = vlaneseq
    %v135 = vshrl.u32 %v134, 7
    %v136 = vsub.s32 %v133, %v135
    %v137 = vrot.slane %v126, %v136
    %v139 = vunpack.c.l.s4 1983009808
    %v140 = vunpack.c.0.s8 %v139
    %v141 = vlaneseq
    %v142 = vshrl.u32 %v141, 7
    %v143 = vsub.s32 %v140, %v142
    %v144 = vrot.slane %v130, %v143
    %v145 = vcombine.high %v137, %v137
    %v146 = vcombine.high %v144, %v144
    %v147 = vcombine.high %v127, %v127
    %v149 = vunpack.c.l.s4 1983009808
    %v150 = vunpack.c.0.s8 %v149
    %v151 = vlaneseq
    %v152 = vshrl.u32 %v151, 7
    %v153 = vsub.s32 %v150, %v152
    %v154 = vrot.slane %v127, %v153
    %v156 = vunpack.c.l.s4 1983009808
    %v157 = vunpack.c.0.s8 %v156
    %v158 = vlaneseq
    %v159 = vshrl.u32 %v158, 7
    %v160 = vsub.s32 %v157, %v159
    %v161 = vrot.slane %v147, %v160
    %v162 = vcombine.high %v154, %v154
    %v163 = vcombine.high %v161, %v161
    %v172 = vsel %vm96, %v137, 0.0
    %v173 = vsel %vm96, %v145, 0.0
    %v174 = vadd.f32 %v172, %v173
    %v175 = vsel %vm96, %v144, 0.0
    %v176 = vadd.f32 %v174, %v175
    %v177 = vsel %vm96, %v146, 0.0
    %v178 = vadd.f32 %v176, %v177
    %v179 = vsel %vm96, %v154, 0.0
    %v180 = vadd.f32 %v178, %v179
    %v181 = vsel %vm96, %v162, 0.0
    %v182 = vadd.f32 %v180, %v181
    %v183 = vsel %vm96, %v161, 0.0
    %v184 = vadd.f32 %v182, %v183
    %v185 = vsel %vm96, %v163, 0.0
    %v186 = vadd.f32 %v184, %v185
    %187 = vadd.xlane.f32.xlu0 %v186
    %v188 = vpop.xlane.xlu0 %187
    %v189 = vmul.f32 %v188, 0.0009775171
    %v190 = vrsqrt.pop %v189
    %v191 = vmul.f32 %v189, %v190
    %vm192 = vcmp.eq.f32.partialorder %v189, inf
    %v193 = vsel %vm192, %v189, %v191
    %vm194 = vcmp.eq.f32.partialorder %v189, 0.0
    %v195 = vand.u32 %v189, 2147483648
    %v196 = vsel %vm194, %v195, %v193
    %v197 = vadd.f32 %v196, 1e-05
    %v198 = vrcp.pop %v197
    %v199 = vld [vmem:[#allocation5] sm:$0xff]
    %v200 = vld [vmem:[#allocation7] sm:$0xff]
    %v202 = vlaneseq
    %v203 = vshrl.u32 %v202, 7
    %v204 = vsub.s32 0, %v203
    %v205 = vrot.slane %v199, %v204
    %v206 = vlaneseq
    %v207 = vshrl.u32 %v206, 7
    %v208 = vsub.s32 1, %v207
    %v209 = vrot.slane %v199, %v208
    %v210 = vlaneseq
    %v211 = vshrl.u32 %v210, 7
    %v212 = vsub.s32 2, %v211
    %v213 = vrot.slane %v199, %v212
    %v214 = vlaneseq
    %v215 = vshrl.u32 %v214, 7
    %v216 = vsub.s32 3, %v215
    %v217 = vrot.slane %v199, %v216
    %v218 = vlaneseq
    %v219 = vshrl.u32 %v218, 7
    %v220 = vsub.s32 4, %v219
    %v221 = vrot.slane %v199, %v220
    %v222 = vlaneseq
    %v223 = vshrl.u32 %v222, 7
    %v224 = vsub.s32 5, %v223
    %v225 = vrot.slane %v199, %v224
    %v226 = vlaneseq
    %v227 = vshrl.u32 %v226, 7
    %v228 = vsub.s32 6, %v227
    %v229 = vrot.slane %v199, %v228
    %v230 = vlaneseq
    %v231 = vshrl.u32 %v230, 7
    %v232 = vsub.s32 7, %v231
    %v233 = vrot.slane %v199, %v232
    %v242 = vmul.f32 %v205, %v198
    %v243 = vmul.f32 %v209, %v198
    %v244 = vmul.f32 %v213, %v198
    %v245 = vmul.f32 %v217, %v198
    %v246 = vmul.f32 %v221, %v198
    %v247 = vmul.f32 %v225, %v198
    %v248 = vmul.f32 %v229, %v198
    %v249 = vmul.f32 %v233, %v198
    %v258 = vcombine.low %v242, %v243
    %v259 = vcombine.low %v244, %v245
    %v261 = vunpack.c.l.s4 1983009808
    %v262 = vunpack.c.0.s8 %v261
    %v263 = vlaneseq
    %v264 = vshrl.u32 %v263, 7
    %v265 = vsub.s32 %v262, %v264
    %v266 = vrot.slane %v258, %v265
    %v268 = vunpack.c.l.s4 1983009808
    %v269 = vunpack.c.0.s8 %v268
    %v270 = vlaneseq
    %v271 = vshrl.u32 %v270, 7
    %v272 = vsub.s32 %v269, %v271
    %v273 = vrot.slane %v259, %v272
    %v274 = vcombine.low %v266, %v273
    %v275 = vcombine.low %v246, %v247
    %v276 = vcombine.low %v248, %v249
    %v278 = vunpack.c.l.s4 1983009808
    %v279 = vunpack.c.0.s8 %v278
    %v280 = vlaneseq
    %v281 = vshrl.u32 %v280, 7
    %v282 = vsub.s32 %v279, %v281
    %v283 = vrot.slane %v275, %v282
    %v285 = vunpack.c.l.s4 1983009808
    %v286 = vunpack.c.0.s8 %v285
    %v287 = vlaneseq
    %v288 = vshrl.u32 %v287, 7
    %v289 = vsub.s32 %v286, %v288
    %v290 = vrot.slane %v276, %v289
    %v291 = vcombine.low %v283, %v290
    %v294 = vmul.f32 %v124, %v274
    %v295 = vmul.f32 %v125, %v291
    %v297 = vlaneseq
    %v298 = vshrl.u32 %v297, 7
    %v299 = vsub.s32 0, %v298
    %v300 = vrot.slane %v200, %v299
    %v301 = vlaneseq
    %v302 = vshrl.u32 %v301, 7
    %v303 = vsub.s32 1, %v302
    %v304 = vrot.slane %v200, %v303
    %v305 = vlaneseq
    %v306 = vshrl.u32 %v305, 7
    %v307 = vsub.s32 2, %v306
    %v308 = vrot.slane %v200, %v307
    %v309 = vlaneseq
    %v310 = vshrl.u32 %v309, 7
    %v311 = vsub.s32 3, %v310
    %v312 = vrot.slane %v200, %v311
    %v313 = vlaneseq
    %v314 = vshrl.u32 %v313, 7
    %v315 = vsub.s32 4, %v314
    %v316 = vrot.slane %v200, %v315
    %v317 = vlaneseq
    %v318 = vshrl.u32 %v317, 7
    %v319 = vsub.s32 5, %v318
    %v320 = vrot.slane %v200, %v319
    %v321 = vlaneseq
    %v322 = vshrl.u32 %v321, 7
    %v323 = vsub.s32 6, %v322
    %v324 = vrot.slane %v200, %v323
    %v325 = vlaneseq
    %v326 = vshrl.u32 %v325, 7
    %v327 = vsub.s32 7, %v326
    %v328 = vrot.slane %v200, %v327
    %v329 = vcombine.low %v300, %v304
    %v330 = vcombine.low %v308, %v312
    %v332 = vunpack.c.l.s4 1983009808
    %v333 = vunpack.c.0.s8 %v332
    %v334 = vlaneseq
    %v335 = vshrl.u32 %v334, 7
    %v336 = vsub.s32 %v333, %v335
    %v337 = vrot.slane %v329, %v336
    %v339 = vunpack.c.l.s4 1983009808
    %v340 = vunpack.c.0.s8 %v339
    %v341 = vlaneseq
    %v342 = vshrl.u32 %v341, 7
    %v343 = vsub.s32 %v340, %v342
    %v344 = vrot.slane %v330, %v343
    %v345 = vcombine.low %v337, %v344
    %v346 = vcombine.low %v316, %v320
    %v347 = vcombine.low %v324, %v328
    %v349 = vunpack.c.l.s4 1983009808
    %v350 = vunpack.c.0.s8 %v349
    %v351 = vlaneseq
    %v352 = vshrl.u32 %v351, 7
    %v353 = vsub.s32 %v350, %v352
    %v354 = vrot.slane %v346, %v353
    %v356 = vunpack.c.l.s4 1983009808
    %v357 = vunpack.c.0.s8 %v356
    %v358 = vlaneseq
    %v359 = vshrl.u32 %v358, 7
    %v360 = vsub.s32 %v357, %v359
    %v361 = vrot.slane %v347, %v360
    %v362 = vcombine.low %v354, %v361
    %v365 = vadd.f32 %v294, %v345
    %v366 = vadd.f32 %v295, %v362
    %367 = vst [vmem:[#allocation8] sm:$0xff] %v365
    %368 = vst [vmem:[#allocation8 + $0x8] sm:$0xff] %v366
    // Predicated region
    $region26: #{tpu_custom_call.1} parent=1 // pred_check
      _
    $region27: #{tpu_custom_call.1} parent=1 // pred_check_branch
      %370 = sbr.rel (0) target = $region29
    $region28: #{tpu_custom_call.1} parent=1 // pred_region
      %s372 = ssub.s32 256, 256
      %373 = vsyncadd [#allocation4], %s372
      %s375 = sshll.u32 [#allocation8], 4
      %s376 = int_to_ptr.vmem [resolvable:$true] %s375
      %378 = dma.vmem_to_hbm [thread:$0]  %s376, 256, %s3, [#allocation4]
    $region29: #{tpu_custom_call.1} parent=1 // pred_fallthru
      _
    // Predicated region
    $region30: #{tpu_custom_call.1} parent=1 // pred_check
      _
    $region31: #{tpu_custom_call.1} parent=1 // pred_check_branch
      %380 = sbr.rel (0) target = $region33
    $region32: #{tpu_custom_call.1} parent=1 // pred_region
      %381 = dma.done [#allocation4], 256
    $region33: #{tpu_custom_call.1} parent=1 // pred_fallthru
      _
    %382 = vsyncpa [#allocation3], 1
    %383 = vsyncpa [#allocation6], 1
    %384 = vsyncpa [#allocation4], 1

</llo_original>
